<compile_context>
chip_gen: v7x
topology: tpu7x:2x2x1
jax: 0.10.0
libtpu: 0.0.40
codegen_flags: <defaults>
</compile_context>

<pallas_src>
import functools

import jax
import jax.numpy as jnp
from jax.experimental import pallas as pl
from jax.experimental.pallas import tpu as pltpu


INPUT_SIZE = 5
HIDDEN_SIZE = 5
OUT_SIZE = 10

_SUBLANES = 8     # f32 sublane count -> batch padding granularity
_OUT_PAD = 128    # lane count -> unmasked lane-dense output store

# Row offsets of the packed weight slab (one sublane tile per block).
_WI_ROW = 0       # rows 0:6   -> [Wi^T ; (bi+bh)]      (6, 5)
_WH_ROW = 8       # rows 8:13  -> Wh^T                  (5, 5)
_WL_ROW = 16      # rows 16:21 -> Wl^T (lane padded)    (5, 128)
_BL_ROW = 21      # row  21    -> bl   (lane padded)    (1, 128)
_SLAB_ROWS = 24


def _nmath_kernel(x_ref, w_ref, out_ref, *, seq_len, batch_pad):
    """Whole forward pass in one kernel invocation (shapes are tiny).

    x_ref  : (S*BP, D_in+1) VMEM  time-major, batch padded to BP, ones column
                                  appended (folds bi+bh into the matmul).
    w_ref  : (24, 128)      VMEM  packed weight slab (see _W*_ROW offsets).
    out_ref: (BP, 128)      VMEM  lane-padded head output.
    """
    H = HIDDEN_SIZE
    DA = INPUT_SIZE + 1

    # ---- hoisted off the serial chain -------------------------------------
    # Input projection for every timestep in ONE MXU matmul; the ones column
    # of x times the bias row of the slab supplies (bi + bh).
    wi_aug = w_ref[_WI_ROW:_WI_ROW + DA, 0:H]                      # (6, 5)
    xw_all = jnp.dot(x_ref[...], wi_aug,
                     preferred_element_type=jnp.float32)           # (S*BP, H)

    # Pre-broadcast the recurrent weight rows to (BP, H) ONCE.  JAX does not
    # CSE broadcast_in_dim, so doing this inside the unrolled loop would emit
    # H*(seq-1) redundant sublane broadcasts.
    wh_rows = [
        jnp.broadcast_to(w_ref[_WH_ROW + k:_WH_ROW + k + 1, 0:H],
                         (batch_pad, H))
        for k in range(H)
    ]

    wl = w_ref[_WL_ROW:_WL_ROW + H, :]                              # (5, 128)
    bl = w_ref[_BL_ROW:_BL_ROW + 1, :]                              # (1, 128)

    # ---- recurrence --------------------------------------------------------
    # Peel step 0: h_{-1} == 0  =>  h_0 = relu(x_0 @ Wi^T + bi + bh).
    h = jnp.maximum(xw_all[0:batch_pad, :], 0.0)

    # Fully unrolled; h @ Wh^T done as H VPU broadcast multiplies with a
    # balanced-tree reduction (add depth 3 instead of a serial length-5
    # chain), keeping the MXU off the serial critical path.
    for i in range(1, seq_len):
        xw_i = xw_all[i * batch_pad:(i + 1) * batch_pad, :]
        p = [h[:, k:k + 1] * wh_rows[k] for k in range(H)]
        pre = ((p[0] + p[1]) + (p[2] + p[3])) + (p[4] + xw_i)
        h = jnp.maximum(pre, 0.0)

    # TODO(synk): benchmark an MXU-resident-Wh variant of the recurrence
    # (pltpu.matmul_push_rhs once, then one matmul_acc_lhs/matmul_pop per
    # step) -- most attractive on v7x where the addressed MRB makes the
    # per-step result read cheap.

    # ---- head, fused at the tail -------------------------------------------
    # (BP, 5) @ (5, 128) + bl -> exactly one vreg wide, unmasked store.
    out_ref[...] = (
        jnp.dot(h, wl, preferred_element_type=jnp.float32) + bl
    ).astype(out_ref.dtype)


def prepare_params(params):
    """One-time parameter-side layout prep: pack everything into one slab.

    Returns a (24, 128) f32 slab:
      rows 0:6,  cols 0:5  -> [Wi^T ; (bi + bh)]
      rows 8:13, cols 0:5  -> Wh^T
      rows 16:21, cols 0:10-> Wl^T
      row  21,   cols 0:10 -> bl
    """
    wi, bi, wh, bh, wl, bl = (
        params["i2h_w"], params["i2h_b"],
        params["h2h_w"], params["h2h_b"],
        params["l_w"], params["l_b"],
    )
    wi_t = jnp.transpose(wi).astype(jnp.float32)                   # (D, H)
    wh_t = jnp.transpose(wh).astype(jnp.float32)                   # (H, H)
    wl_t = jnp.transpose(wl).astype(jnp.float32)                   # (H, O)
    bhi = (bi + bh).astype(jnp.float32)                            # (H,)

    slab = jnp.zeros((_SLAB_ROWS, _OUT_PAD), jnp.float32)
    slab = slab.at[_WI_ROW:_WI_ROW + INPUT_SIZE, 0:HIDDEN_SIZE].set(wi_t)
    slab = slab.at[_WI_ROW + INPUT_SIZE, 0:HIDDEN_SIZE].set(bhi)
    slab = slab.at[_WH_ROW:_WH_ROW + HIDDEN_SIZE, 0:HIDDEN_SIZE].set(wh_t)
    slab = slab.at[_WL_ROW:_WL_ROW + HIDDEN_SIZE, 0:OUT_SIZE].set(wl_t)
    slab = slab.at[_BL_ROW, 0:OUT_SIZE].set(bl.astype(jnp.float32))
    return slab


def _forward_impl(x, w_slab):
    """x: (batch, seq, 5) f32, w_slab: (24, 128) f32 -> (batch, 10) f32."""
    B, S, D = x.shape
    BP = ((B + _SUBLANES - 1) // _SUBLANES) * _SUBLANES  # batch padded to sublanes

    # Layout plumbing (all under jit -> single dispatch, fused with the call):
    # time-major, batch-padded, ones column appended to fold (bi + bh).
    x_sbd = jnp.transpose(x, (1, 0, 2)).astype(jnp.float32)        # (S, B, D)
    x_pad = jnp.pad(x_sbd, ((0, 0), (0, BP - B), (0, 0)))          # (S, BP, D)
    ones = jnp.ones((S, BP, 1), jnp.float32)
    x_aug = jnp.concatenate([x_pad, ones], axis=-1)                # (S, BP, D+1)
    x_flat = x_aug.reshape(S * BP, D + 1)                          # (S*BP, D+1)

    # TODO(synk): if batch grows beyond a few sublane tiles, add a batch-tiled
    # grid with dimension_semantics=("parallel",) so v7x's two TensorCores
    # split it, and re-derive the x tile against v7x's 64 MiB VMEM.
    vmem = pl.BlockSpec(memory_space=pltpu.MemorySpace.VMEM)
    kernel = functools.partial(_nmath_kernel, seq_len=S, batch_pad=BP)
    out_pad = pl.pallas_call(
        kernel,
        out_shape=jax.ShapeDtypeStruct((BP, _OUT_PAD), jnp.float32),
        in_specs=[vmem, vmem],
        out_specs=vmem,
    )(x_flat, w_slab)

    # Drop batch padding (padded rows hold relu(bias) junk) and lane padding.
    # NOTE: this slice is part of the kernel contract -- never consume out_pad
    # directly.
    return out_pad[:B, :OUT_SIZE]


# End-to-end jitted forward (layout plumbing + pallas_call in one executable).
nmath_forward = jax.jit(_forward_impl)


def _reference_forward(x, params):
    """Pure-JAX reference mirroring the PyTorch module exactly."""
    wi, bi, wh, bh, wl, bl = (
        params["i2h_w"], params["i2h_b"],
        params["h2h_w"], params["h2h_b"],
        params["l_w"], params["l_b"],
    )
    B, S, _ = x.shape
    h = jnp.zeros((B, HIDDEN_SIZE), jnp.float32)
    for i in range(S):
        inp = x[:, i]
        h = jax.nn.relu(h @ wh.T + bh + inp @ wi.T + bi)
    return h @ wl.T + bl


def _init_params(key):
    """Deterministic init mimicking nn.Linear defaults (uniform +/-1/sqrt(fan_in))."""
    ks = jax.random.split(key, 6)

    def lin(kw, kb, fan_in, fan_out):
        bound = 1.0 / jnp.sqrt(fan_in)
        w = jax.random.uniform(kw, (fan_out, fan_in), jnp.float32, -bound, bound)
        b = jax.random.uniform(kb, (fan_out,), jnp.float32, -bound, bound)
        return w, b

    i2h_w, i2h_b = lin(ks[0], ks[1], INPUT_SIZE, HIDDEN_SIZE)
    h2h_w, h2h_b = lin(ks[2], ks[3], HIDDEN_SIZE, HIDDEN_SIZE)
    l_w, l_b = lin(ks[4], ks[5], HIDDEN_SIZE, OUT_SIZE)
    return {
        "i2h_w": i2h_w, "i2h_b": i2h_b,
        "h2h_w": h2h_w, "h2h_b": h2h_b,
        "l_w": l_w, "l_b": l_b,
    }


if __name__ == "__main__":
    key = jax.random.PRNGKey(0)
    k_param, k_x = jax.random.split(key)

    params = _init_params(k_param)
    # One-time parameter layout prep (NOT re-done per forward call).
    w_slab = jax.block_until_ready(prepare_params(params))

    batch, seq = 2, 8
    x = jax.random.normal(k_x, (batch, seq, INPUT_SIZE), jnp.float32)

    out = nmath_forward(x, w_slab)
    out = jax.block_until_ready(out)

    ref = _reference_forward(x, params)
    assert out.shape == (batch, OUT_SIZE), out.shape
    assert jnp.allclose(out, ref, atol=1e-5, rtol=1e-5), (out, ref)

    print("KERNEL_OK")
</pallas_src>

<mosaic_0001>
module attributes {stable_mosaic.version = 11 : i64} {
  func.func @_nmath_kernel(%arg0: memref<64x6xf32, #tpu.memory_space<vmem>>, %arg1: memref<24x128xf32, #tpu.memory_space<vmem>>, %arg2: memref<8x128xf32, #tpu.memory_space<vmem>>) attributes {dimension_semantics = [], scalar_prefetch = 0 : i64, scratch_operands = 0 : i64, tpu.core_type = #tpu.core_type<tc>} {
    %c0 = arith.constant 0 : index
    %c0_0 = arith.constant 0 : index
    %0 = vector.load %arg1[%c0, %c0_0] : memref<24x128xf32, #tpu.memory_space<vmem>>, vector<6x5xf32>
    %c0_1 = arith.constant 0 : index
    %c0_2 = arith.constant 0 : index
    %1 = vector.load %arg0[%c0_1, %c0_2] : memref<64x6xf32, #tpu.memory_space<vmem>>, vector<64x6xf32>
    %cst = arith.constant dense<0.000000e+00> : vector<64x5xf32>
    %2 = tpu.matmul %1, %0, %cst {dimension_numbers = #tpu.dot_dimension_numbers<[1], [0], [0], [1], [0, 0, 1, 1], [], []>} : vector<64x6xf32>, vector<6x5xf32>, vector<64x5xf32> -> vector<64x5xf32>
    %c8 = arith.constant 8 : index
    %c0_3 = arith.constant 0 : index
    %3 = vector.load %arg1[%c8, %c0_3] : memref<24x128xf32, #tpu.memory_space<vmem>>, vector<1x5xf32>
    %4 = vector.shape_cast %3 : vector<1x5xf32> to vector<1x5xf32>
    %5 = vector.broadcast %4 : vector<1x5xf32> to vector<8x5xf32>
    %c9 = arith.constant 9 : index
    %c0_4 = arith.constant 0 : index
    %6 = vector.load %arg1[%c9, %c0_4] : memref<24x128xf32, #tpu.memory_space<vmem>>, vector<1x5xf32>
    %7 = vector.shape_cast %6 : vector<1x5xf32> to vector<1x5xf32>
    %8 = vector.broadcast %7 : vector<1x5xf32> to vector<8x5xf32>
    %c10 = arith.constant 10 : index
    %c0_5 = arith.constant 0 : index
    %9 = vector.load %arg1[%c10, %c0_5] : memref<24x128xf32, #tpu.memory_space<vmem>>, vector<1x5xf32>
    %10 = vector.shape_cast %9 : vector<1x5xf32> to vector<1x5xf32>
    %11 = vector.broadcast %10 : vector<1x5xf32> to vector<8x5xf32>
    %c11 = arith.constant 11 : index
    %c0_6 = arith.constant 0 : index
    %12 = vector.load %arg1[%c11, %c0_6] : memref<24x128xf32, #tpu.memory_space<vmem>>, vector<1x5xf32>
    %13 = vector.shape_cast %12 : vector<1x5xf32> to vector<1x5xf32>
    %14 = vector.broadcast %13 : vector<1x5xf32> to vector<8x5xf32>
    %c12 = arith.constant 12 : index
    %c0_7 = arith.constant 0 : index
    %15 = vector.load %arg1[%c12, %c0_7] : memref<24x128xf32, #tpu.memory_space<vmem>>, vector<1x5xf32>
    %16 = vector.shape_cast %15 : vector<1x5xf32> to vector<1x5xf32>
    %17 = vector.broadcast %16 : vector<1x5xf32> to vector<8x5xf32>
    %c16 = arith.constant 16 : index
    %c0_8 = arith.constant 0 : index
    %18 = vector.load %arg1[%c16, %c0_8] : memref<24x128xf32, #tpu.memory_space<vmem>>, vector<5x128xf32>
    %c21 = arith.constant 21 : index
    %c0_9 = arith.constant 0 : index
    %19 = vector.load %arg1[%c21, %c0_9] : memref<24x128xf32, #tpu.memory_space<vmem>>, vector<1x128xf32>
    %20 = vector.extract_strided_slice %2 {offsets = [0, 0], sizes = [8, 5], strides = [1, 1]} : vector<64x5xf32> to vector<8x5xf32>
    %cst_10 = arith.constant 0.000000e+00 : f32
    %21 = vector.broadcast %cst_10 : f32 to vector<8x5xf32>
    %22 = arith.maximumf %20, %21 : vector<8x5xf32>
    %23 = vector.extract_strided_slice %2 {offsets = [8, 0], sizes = [8, 5], strides = [1, 1]} : vector<64x5xf32> to vector<8x5xf32>
    %24 = vector.extract_strided_slice %22 {offsets = [0, 0], sizes = [8, 1], strides = [1, 1]} : vector<8x5xf32> to vector<8x1xf32>
    %25 = vector.broadcast %24 : vector<8x1xf32> to vector<8x5xf32>
    %26 = arith.mulf %25, %5 : vector<8x5xf32>
    %27 = vector.extract_strided_slice %22 {offsets = [0, 1], sizes = [8, 1], strides = [1, 1]} : vector<8x5xf32> to vector<8x1xf32>
    %28 = vector.broadcast %27 : vector<8x1xf32> to vector<8x5xf32>
    %29 = arith.mulf %28, %8 : vector<8x5xf32>
    %30 = vector.extract_strided_slice %22 {offsets = [0, 2], sizes = [8, 1], strides = [1, 1]} : vector<8x5xf32> to vector<8x1xf32>
    %31 = vector.broadcast %30 : vector<8x1xf32> to vector<8x5xf32>
    %32 = arith.mulf %31, %11 : vector<8x5xf32>
    %33 = vector.extract_strided_slice %22 {offsets = [0, 3], sizes = [8, 1], strides = [1, 1]} : vector<8x5xf32> to vector<8x1xf32>
    %34 = vector.broadcast %33 : vector<8x1xf32> to vector<8x5xf32>
    %35 = arith.mulf %34, %14 : vector<8x5xf32>
    %36 = vector.extract_strided_slice %22 {offsets = [0, 4], sizes = [8, 1], strides = [1, 1]} : vector<8x5xf32> to vector<8x1xf32>
    %37 = vector.broadcast %36 : vector<8x1xf32> to vector<8x5xf32>
    %38 = arith.mulf %37, %17 : vector<8x5xf32>
    %39 = arith.addf %26, %29 : vector<8x5xf32>
    %40 = arith.addf %32, %35 : vector<8x5xf32>
    %41 = arith.addf %39, %40 : vector<8x5xf32>
    %42 = arith.addf %38, %23 : vector<8x5xf32>
    %43 = arith.addf %41, %42 : vector<8x5xf32>
    %cst_11 = arith.constant 0.000000e+00 : f32
    %44 = vector.broadcast %cst_11 : f32 to vector<8x5xf32>
    %45 = arith.maximumf %43, %44 : vector<8x5xf32>
    %46 = vector.extract_strided_slice %2 {offsets = [16, 0], sizes = [8, 5], strides = [1, 1]} : vector<64x5xf32> to vector<8x5xf32>
    %47 = vector.extract_strided_slice %45 {offsets = [0, 0], sizes = [8, 1], strides = [1, 1]} : vector<8x5xf32> to vector<8x1xf32>
    %48 = vector.broadcast %47 : vector<8x1xf32> to vector<8x5xf32>
    %49 = arith.mulf %48, %5 : vector<8x5xf32>
    %50 = vector.extract_strided_slice %45 {offsets = [0, 1], sizes = [8, 1], strides = [1, 1]} : vector<8x5xf32> to vector<8x1xf32>
    %51 = vector.broadcast %50 : vector<8x1xf32> to vector<8x5xf32>
    %52 = arith.mulf %51, %8 : vector<8x5xf32>
    %53 = vector.extract_strided_slice %45 {offsets = [0, 2], sizes = [8, 1], strides = [1, 1]} : vector<8x5xf32> to vector<8x1xf32>
    %54 = vector.broadcast %53 : vector<8x1xf32> to vector<8x5xf32>
    %55 = arith.mulf %54, %11 : vector<8x5xf32>
    %56 = vector.extract_strided_slice %45 {offsets = [0, 3], sizes = [8, 1], strides = [1, 1]} : vector<8x5xf32> to vector<8x1xf32>
    %57 = vector.broadcast %56 : vector<8x1xf32> to vector<8x5xf32>
    %58 = arith.mulf %57, %14 : vector<8x5xf32>
    %59 = vector.extract_strided_slice %45 {offsets = [0, 4], sizes = [8, 1], strides = [1, 1]} : vector<8x5xf32> to vector<8x1xf32>
    %60 = vector.broadcast %59 : vector<8x1xf32> to vector<8x5xf32>
    %61 = arith.mulf %60, %17 : vector<8x5xf32>
    %62 = arith.addf %49, %52 : vector<8x5xf32>
    %63 = arith.addf %55, %58 : vector<8x5xf32>
    %64 = arith.addf %62, %63 : vector<8x5xf32>
    %65 = arith.addf %61, %46 : vector<8x5xf32>
    %66 = arith.addf %64, %65 : vector<8x5xf32>
    %cst_12 = arith.constant 0.000000e+00 : f32
    %67 = vector.broadcast %cst_12 : f32 to vector<8x5xf32>
    %68 = arith.maximumf %66, %67 : vector<8x5xf32>
    %69 = vector.extract_strided_slice %2 {offsets = [24, 0], sizes = [8, 5], strides = [1, 1]} : vector<64x5xf32> to vector<8x5xf32>
    %70 = vector.extract_strided_slice %68 {offsets = [0, 0], sizes = [8, 1], strides = [1, 1]} : vector<8x5xf32> to vector<8x1xf32>
    %71 = vector.broadcast %70 : vector<8x1xf32> to vector<8x5xf32>
    %72 = arith.mulf %71, %5 : vector<8x5xf32>
    %73 = vector.extract_strided_slice %68 {offsets = [0, 1], sizes = [8, 1], strides = [1, 1]} : vector<8x5xf32> to vector<8x1xf32>
    %74 = vector.broadcast %73 : vector<8x1xf32> to vector<8x5xf32>
    %75 = arith.mulf %74, %8 : vector<8x5xf32>
    %76 = vector.extract_strided_slice %68 {offsets = [0, 2], sizes = [8, 1], strides = [1, 1]} : vector<8x5xf32> to vector<8x1xf32>
    %77 = vector.broadcast %76 : vector<8x1xf32> to vector<8x5xf32>
    %78 = arith.mulf %77, %11 : vector<8x5xf32>
    %79 = vector.extract_strided_slice %68 {offsets = [0, 3], sizes = [8, 1], strides = [1, 1]} : vector<8x5xf32> to vector<8x1xf32>
    %80 = vector.broadcast %79 : vector<8x1xf32> to vector<8x5xf32>
    %81 = arith.mulf %80, %14 : vector<8x5xf32>
    %82 = vector.extract_strided_slice %68 {offsets = [0, 4], sizes = [8, 1], strides = [1, 1]} : vector<8x5xf32> to vector<8x1xf32>
    %83 = vector.broadcast %82 : vector<8x1xf32> to vector<8x5xf32>
    %84 = arith.mulf %83, %17 : vector<8x5xf32>
    %85 = arith.addf %72, %75 : vector<8x5xf32>
    %86 = arith.addf %78, %81 : vector<8x5xf32>
    %87 = arith.addf %85, %86 : vector<8x5xf32>
    %88 = arith.addf %84, %69 : vector<8x5xf32>
    %89 = arith.addf %87, %88 : vector<8x5xf32>
    %cst_13 = arith.constant 0.000000e+00 : f32
    %90 = vector.broadcast %cst_13 : f32 to vector<8x5xf32>
    %91 = arith.maximumf %89, %90 : vector<8x5xf32>
    %92 = vector.extract_strided_slice %2 {offsets = [32, 0], sizes = [8, 5], strides = [1, 1]} : vector<64x5xf32> to vector<8x5xf32>
    %93 = vector.extract_strided_slice %91 {offsets = [0, 0], sizes = [8, 1], strides = [1, 1]} : vector<8x5xf32> to vector<8x1xf32>
    %94 = vector.broadcast %93 : vector<8x1xf32> to vector<8x5xf32>
    %95 = arith.mulf %94, %5 : vector<8x5xf32>
    %96 = vector.extract_strided_slice %91 {offsets = [0, 1], sizes = [8, 1], strides = [1, 1]} : vector<8x5xf32> to vector<8x1xf32>
    %97 = vector.broadcast %96 : vector<8x1xf32> to vector<8x5xf32>
    %98 = arith.mulf %97, %8 : vector<8x5xf32>
    %99 = vector.extract_strided_slice %91 {offsets = [0, 2], sizes = [8, 1], strides = [1, 1]} : vector<8x5xf32> to vector<8x1xf32>
    %100 = vector.broadcast %99 : vector<8x1xf32> to vector<8x5xf32>
    %101 = arith.mulf %100, %11 : vector<8x5xf32>
    %102 = vector.extract_strided_slice %91 {offsets = [0, 3], sizes = [8, 1], strides = [1, 1]} : vector<8x5xf32> to vector<8x1xf32>
    %103 = vector.broadcast %102 : vector<8x1xf32> to vector<8x5xf32>
    %104 = arith.mulf %103, %14 : vector<8x5xf32>
    %105 = vector.extract_strided_slice %91 {offsets = [0, 4], sizes = [8, 1], strides = [1, 1]} : vector<8x5xf32> to vector<8x1xf32>
    %106 = vector.broadcast %105 : vector<8x1xf32> to vector<8x5xf32>
    %107 = arith.mulf %106, %17 : vector<8x5xf32>
    %108 = arith.addf %95, %98 : vector<8x5xf32>
    %109 = arith.addf %101, %104 : vector<8x5xf32>
    %110 = arith.addf %108, %109 : vector<8x5xf32>
    %111 = arith.addf %107, %92 : vector<8x5xf32>
    %112 = arith.addf %110, %111 : vector<8x5xf32>
    %cst_14 = arith.constant 0.000000e+00 : f32
    %113 = vector.broadcast %cst_14 : f32 to vector<8x5xf32>
    %114 = arith.maximumf %112, %113 : vector<8x5xf32>
    %115 = vector.extract_strided_slice %2 {offsets = [40, 0], sizes = [8, 5], strides = [1, 1]} : vector<64x5xf32> to vector<8x5xf32>
    %116 = vector.extract_strided_slice %114 {offsets = [0, 0], sizes = [8, 1], strides = [1, 1]} : vector<8x5xf32> to vector<8x1xf32>
    %117 = vector.broadcast %116 : vector<8x1xf32> to vector<8x5xf32>
    %118 = arith.mulf %117, %5 : vector<8x5xf32>
    %119 = vector.extract_strided_slice %114 {offsets = [0, 1], sizes = [8, 1], strides = [1, 1]} : vector<8x5xf32> to vector<8x1xf32>
    %120 = vector.broadcast %119 : vector<8x1xf32> to vector<8x5xf32>
    %121 = arith.mulf %120, %8 : vector<8x5xf32>
    %122 = vector.extract_strided_slice %114 {offsets = [0, 2], sizes = [8, 1], strides = [1, 1]} : vector<8x5xf32> to vector<8x1xf32>
    %123 = vector.broadcast %122 : vector<8x1xf32> to vector<8x5xf32>
    %124 = arith.mulf %123, %11 : vector<8x5xf32>
    %125 = vector.extract_strided_slice %114 {offsets = [0, 3], sizes = [8, 1], strides = [1, 1]} : vector<8x5xf32> to vector<8x1xf32>
    %126 = vector.broadcast %125 : vector<8x1xf32> to vector<8x5xf32>
    %127 = arith.mulf %126, %14 : vector<8x5xf32>
    %128 = vector.extract_strided_slice %114 {offsets = [0, 4], sizes = [8, 1], strides = [1, 1]} : vector<8x5xf32> to vector<8x1xf32>
    %129 = vector.broadcast %128 : vector<8x1xf32> to vector<8x5xf32>
    %130 = arith.mulf %129, %17 : vector<8x5xf32>
    %131 = arith.addf %118, %121 : vector<8x5xf32>
    %132 = arith.addf %124, %127 : vector<8x5xf32>
    %133 = arith.addf %131, %132 : vector<8x5xf32>
    %134 = arith.addf %130, %115 : vector<8x5xf32>
    %135 = arith.addf %133, %134 : vector<8x5xf32>
    %cst_15 = arith.constant 0.000000e+00 : f32
    %136 = vector.broadcast %cst_15 : f32 to vector<8x5xf32>
    %137 = arith.maximumf %135, %136 : vector<8x5xf32>
    %138 = vector.extract_strided_slice %2 {offsets = [48, 0], sizes = [8, 5], strides = [1, 1]} : vector<64x5xf32> to vector<8x5xf32>
    %139 = vector.extract_strided_slice %137 {offsets = [0, 0], sizes = [8, 1], strides = [1, 1]} : vector<8x5xf32> to vector<8x1xf32>
    %140 = vector.broadcast %139 : vector<8x1xf32> to vector<8x5xf32>
    %141 = arith.mulf %140, %5 : vector<8x5xf32>
    %142 = vector.extract_strided_slice %137 {offsets = [0, 1], sizes = [8, 1], strides = [1, 1]} : vector<8x5xf32> to vector<8x1xf32>
    %143 = vector.broadcast %142 : vector<8x1xf32> to vector<8x5xf32>
    %144 = arith.mulf %143, %8 : vector<8x5xf32>
    %145 = vector.extract_strided_slice %137 {offsets = [0, 2], sizes = [8, 1], strides = [1, 1]} : vector<8x5xf32> to vector<8x1xf32>
    %146 = vector.broadcast %145 : vector<8x1xf32> to vector<8x5xf32>
    %147 = arith.mulf %146, %11 : vector<8x5xf32>
    %148 = vector.extract_strided_slice %137 {offsets = [0, 3], sizes = [8, 1], strides = [1, 1]} : vector<8x5xf32> to vector<8x1xf32>
    %149 = vector.broadcast %148 : vector<8x1xf32> to vector<8x5xf32>
    %150 = arith.mulf %149, %14 : vector<8x5xf32>
    %151 = vector.extract_strided_slice %137 {offsets = [0, 4], sizes = [8, 1], strides = [1, 1]} : vector<8x5xf32> to vector<8x1xf32>
    %152 = vector.broadcast %151 : vector<8x1xf32> to vector<8x5xf32>
    %153 = arith.mulf %152, %17 : vector<8x5xf32>
    %154 = arith.addf %141, %144 : vector<8x5xf32>
    %155 = arith.addf %147, %150 : vector<8x5xf32>
    %156 = arith.addf %154, %155 : vector<8x5xf32>
    %157 = arith.addf %153, %138 : vector<8x5xf32>
    %158 = arith.addf %156, %157 : vector<8x5xf32>
    %cst_16 = arith.constant 0.000000e+00 : f32
    %159 = vector.broadcast %cst_16 : f32 to vector<8x5xf32>
    %160 = arith.maximumf %158, %159 : vector<8x5xf32>
    %161 = vector.extract_strided_slice %2 {offsets = [56, 0], sizes = [8, 5], strides = [1, 1]} : vector<64x5xf32> to vector<8x5xf32>
    %162 = vector.extract_strided_slice %160 {offsets = [0, 0], sizes = [8, 1], strides = [1, 1]} : vector<8x5xf32> to vector<8x1xf32>
    %163 = vector.broadcast %162 : vector<8x1xf32> to vector<8x5xf32>
    %164 = arith.mulf %163, %5 : vector<8x5xf32>
    %165 = vector.extract_strided_slice %160 {offsets = [0, 1], sizes = [8, 1], strides = [1, 1]} : vector<8x5xf32> to vector<8x1xf32>
    %166 = vector.broadcast %165 : vector<8x1xf32> to vector<8x5xf32>
    %167 = arith.mulf %166, %8 : vector<8x5xf32>
    %168 = vector.extract_strided_slice %160 {offsets = [0, 2], sizes = [8, 1], strides = [1, 1]} : vector<8x5xf32> to vector<8x1xf32>
    %169 = vector.broadcast %168 : vector<8x1xf32> to vector<8x5xf32>
    %170 = arith.mulf %169, %11 : vector<8x5xf32>
    %171 = vector.extract_strided_slice %160 {offsets = [0, 3], sizes = [8, 1], strides = [1, 1]} : vector<8x5xf32> to vector<8x1xf32>
    %172 = vector.broadcast %171 : vector<8x1xf32> to vector<8x5xf32>
    %173 = arith.mulf %172, %14 : vector<8x5xf32>
    %174 = vector.extract_strided_slice %160 {offsets = [0, 4], sizes = [8, 1], strides = [1, 1]} : vector<8x5xf32> to vector<8x1xf32>
    %175 = vector.broadcast %174 : vector<8x1xf32> to vector<8x5xf32>
    %176 = arith.mulf %175, %17 : vector<8x5xf32>
    %177 = arith.addf %164, %167 : vector<8x5xf32>
    %178 = arith.addf %170, %173 : vector<8x5xf32>
    %179 = arith.addf %177, %178 : vector<8x5xf32>
    %180 = arith.addf %176, %161 : vector<8x5xf32>
    %181 = arith.addf %179, %180 : vector<8x5xf32>
    %cst_17 = arith.constant 0.000000e+00 : f32
    %182 = vector.broadcast %cst_17 : f32 to vector<8x5xf32>
    %183 = arith.maximumf %181, %182 : vector<8x5xf32>
    %cst_18 = arith.constant dense<0.000000e+00> : vector<8x128xf32>
    %184 = tpu.matmul %183, %18, %cst_18 {dimension_numbers = #tpu.dot_dimension_numbers<[1], [0], [0], [1], [0, 0, 1, 1], [], []>} : vector<8x5xf32>, vector<5x128xf32>, vector<8x128xf32> -> vector<8x128xf32>
    %185 = vector.broadcast %19 : vector<1x128xf32> to vector<8x128xf32>
    %186 = arith.addf %184, %185 : vector<8x128xf32>
    %c0_19 = arith.constant 0 : index
    %c0_20 = arith.constant 0 : index
    %187 = vector.load %arg2[%c0_19, %c0_20] : memref<8x128xf32, #tpu.memory_space<vmem>>, vector<8x128xf32>
    tpu.vector_store %arg2[%c0_19, %c0_20], %186 {strides = array<i32>} : memref<8x128xf32, #tpu.memory_space<vmem>>, vector<8x128xf32>,
    return
  }
}

</mosaic_0001>

<llo_original>
// kernel: _forward_impl.1
$region0: #{_forward_impl.1}
  #allocation0 [shape = 'u32[]', space=smem, size = 0x4, offset = 0x4, fixed_abs, tag = 'smem constant byte address 0x4 - core index']
  #allocation1 [shape = 'u32[144,128]{1,0:T(1,128)}', space=vmem, size = 0x12000, scoped, tag = 'internal scratch']
  %s0 = inlined_call_operand.vmem [shape: f32[64,6], index: 0, kind: input, shape index: {}]
  %s1 = inlined_call_operand.vmem [shape: f32[24,128], index: 1, kind: input, shape index: {}]
  %s2 = inlined_call_operand.vmem [shape: f32[8,128], index: 2, kind: output, shape index: {}]
  %s3 = sld [smem:[#allocation0]]
  $region18: #{_forward_impl.1} parent=0
    _
  %s5 = ssub.s32 1, %s3
  %s6 = scalar_select 0, %s5, %s3
  // Predicated region
  $region2: #{_forward_impl.1} parent=0 // pred_check
    _
  $region3: #{_forward_impl.1} parent=0 // pred_check_branch
    %8 = sbr.rel (0) target = $region5
  $region4: #{_forward_impl.1} parent=0 // pred_region
    _
  $region5: #{_forward_impl.1} parent=0 // pred_fallthru
    _
  // Predicated region
  $region6: #{_forward_impl.1} parent=0 // pred_check
    _
  $region7: #{_forward_impl.1} parent=0 // pred_check_branch
    %10 = sbr.rel (0) target = $region9
  $region8: #{_forward_impl.1} parent=0 // pred_region
    _
  $region9: #{_forward_impl.1} parent=0 // pred_fallthru
    _
  %v11 = vld [vmem:[%s1] sm:$0x3f]
  %v12 = vld [vmem:[%s0] sm:$0xff]
  %v13 = vld [vmem:[%s0 + $0x8] sm:$0xff]
  %v14 = vld [vmem:[%s0 + $0x10] sm:$0xff]
  %v15 = vld [vmem:[%s0 + $0x18] sm:$0xff]
  %v16 = vld [vmem:[%s0 + $0x20] sm:$0xff]
  %v17 = vld [vmem:[%s0 + $0x28] sm:$0xff]
  %v18 = vld [vmem:[%s0 + $0x30] sm:$0xff]
  %v19 = vld [vmem:[%s0 + $0x38] sm:$0xff]
  %vm20 = vcmask 48128
  %v22 = vsel %vm20, %v12, 0
  %v25 = vsel %vm20, %v13, 0
  %v28 = vsel %vm20, %v14, 0
  %v31 = vsel %vm20, %v15, 0
  %v34 = vsel %vm20, %v16, 0
  %v37 = vsel %vm20, %v17, 0
  %v40 = vsel %vm20, %v18, 0
  %v43 = vsel %vm20, %v19, 0
  %vm45 = vcmask 1045504
  %v47 = vsel %vm45, %v11, 0
  %49 = vmatprep.subr.mxu0 0.0
  %50 = vmatpush1.msra.mxu0 %v47
  %51 = vmatprep.subr.mxu0 0.0
  %52 = vmatpush1.msra.mxu0 0.0
  %53 = vmatprep.subr.mxu0 0.0
  %54 = vmatpush1.msra.mxu0 0.0
  %55 = vmatprep.subr.mxu0 0.0
  %56 = vmatpush1.msra.mxu0 0.0
  %57 = vmatprep.subr.mxu0 0.0
  %58 = vmatpush1.msra.mxu0 0.0
  %59 = vmatprep.subr.mxu0 0.0
  %60 = vmatpush1.msra.mxu0 0.0
  %61 = vmatprep.subr.mxu0 0.0
  %62 = vmatpush1.msra.mxu0 0.0
  %63 = vmatprep.subr.mxu0 0.0
  %64 = vmatpush1.msra.mxu0 0.0
  %65 = vmatprep.subr.mxu0 0.0
  %66 = vmatpush1.msra.mxu0 0.0
  %67 = vmatprep.subr.mxu0 0.0
  %68 = vmatpush1.msra.mxu0 0.0
  %69 = vmatprep.subr.mxu0 0.0
  %70 = vmatpush1.msra.mxu0 0.0
  %71 = vmatprep.subr.mxu0 0.0
  %72 = vmatpush1.msra.mxu0 0.0
  %73 = vmatprep.subr.mxu0 0.0
  %74 = vmatpush1.msra.mxu0 0.0
  %75 = vmatprep.subr.mxu0 0.0
  %76 = vmatpush1.msra.mxu0 0.0
  %77 = vmatprep.subr.mxu0 0.0
  %78 = vmatpush1.msra.mxu0 0.0
  %79 = vmatprep.subr.mxu0 0.0
  %80 = vmatpush1.msra.mxu0 0.0
  %81 = vmatprep.subr.mxu0 0.0
  %82 = vmatpush1.msra.mxu0 0.0
  %83 = vmatprep.subr.mxu0 0.0
  %84 = vmatpush1.msra.mxu0 0.0
  %85 = vmatprep.subr.mxu0 0.0
  %86 = vmatpush1.msra.mxu0 0.0
  %87 = vmatprep.subr.mxu0 0.0
  %88 = vmatpush1.msra.mxu0 0.0
  %89 = vmatprep.subr.mxu0 0.0
  %90 = vmatpush1.msra.mxu0 0.0
  %91 = vmatprep.subr.mxu0 0.0
  %92 = vmatpush1.msra.mxu0 0.0
  %93 = vmatprep.subr.mxu0 0.0
  %94 = vmatpush1.msra.mxu0 0.0
  %95 = vmatprep.subr.mxu0 0.0
  %96 = vmatpush1.msra.mxu0 0.0
  %97 = vmatprep.subr.mxu0 0.0
  %98 = vmatpush1.msra.mxu0 0.0
  %99 = vmatprep.subr.mxu0 0.0
  %100 = vmatpush1.msra.mxu0 0.0
  %101 = vmatprep.subr.mxu0 0.0
  %102 = vmatpush1.msra.mxu0 0.0
  %103 = vmatprep.subr.mxu0 0.0
  %104 = vmatpush1.msra.mxu0 0.0
  %105 = vmatprep.subr.mxu0 0.0
  %106 = vmatpush1.msra.mxu0 0.0
  %107 = vmatprep.subr.mxu0 0.0
  %108 = vmatpush1.msra.mxu0 0.0
  %109 = vmatprep.subr.mxu0 0.0
  %110 = vmatpush1.msra.mxu0 0.0
  %111 = vmatprep.subr.mxu0 0.0
  %112 = vmatpush1.msra.mxu0 0.0
  %113 = vmatprep.mubr.f32.mxu0 0.0
  %114 = vmatmul.mubr.f32.gmra.mrb[0].mxu0 %v22
  %v115 = vpop.f32.mrb[0].mxu0
  %v116 = vadd.f32 0.0, %v115
  %v117 = vpop.f32.mrb[0].mxu0
  %118 = vmatprep.mubr.f32.mxu0 0.0
  %119 = vmatmul.mubr.f32.gmra.mrb[0].mxu0 %v25
  %v120 = vpop.f32.mrb[0].mxu0
  %v121 = vadd.f32 0.0, %v120
  %v122 = vpop.f32.mrb[0].mxu0
  %123 = vmatprep.mubr.f32.mxu0 0.0
  %124 = vmatmul.mubr.f32.gmra.mrb[0].mxu0 %v28
  %v125 = vpop.f32.mrb[0].mxu0
  %v126 = vadd.f32 0.0, %v125
  %v127 = vpop.f32.mrb[0].mxu0
  %128 = vmatprep.mubr.f32.mxu0 0.0
  %129 = vmatmul.mubr.f32.gmra.mrb[0].mxu0 %v31
  %v130 = vpop.f32.mrb[0].mxu0
  %v131 = vadd.f32 0.0, %v130
  %v132 = vpop.f32.mrb[0].mxu0
  %133 = vmatprep.mubr.f32.mxu0 0.0
  %134 = vmatmul.mubr.f32.gmra.mrb[0].mxu0 %v34
  %v135 = vpop.f32.mrb[0].mxu0
  %v136 = vadd.f32 0.0, %v135
  %v137 = vpop.f32.mrb[0].mxu0
  %138 = vmatprep.mubr.f32.mxu0 0.0
  %139 = vmatmul.mubr.f32.gmra.mrb[0].mxu0 %v37
  %v140 = vpop.f32.mrb[0].mxu0
  %v141 = vadd.f32 0.0, %v140
  %v142 = vpop.f32.mrb[0].mxu0
  %143 = vmatprep.mubr.f32.mxu0 0.0
  %144 = vmatmul.mubr.f32.gmra.mrb[0].mxu0 %v40
  %v145 = vpop.f32.mrb[0].mxu0
  %v146 = vadd.f32 0.0, %v145
  %v147 = vpop.f32.mrb[0].mxu0
  %148 = vmatprep.mubr.f32.mxu0 0.0
  %149 = vmatmul.mubr.f32.gmra.mrb[0].mxu0 %v43
  %v150 = vpop.f32.mrb[0].mxu0
  %v151 = vadd.f32 0.0, %v150
  %v152 = vpop.f32.mrb[0].mxu0
  %153 = vdwg.mxu0
  %v154 = vld [vmem:[%s1 + $0x8] sm:$0x1]
  %v155 = vlaneseq
  %v156 = vshrl.u32 %v155, 7
  %v157 = vsub.s32 0, %v156
  %v158 = vrot.slane %v154, %v157
  %v159 = vld [vmem:[%s1 + $0x9] sm:$0x1]
  %v160 = vlaneseq
  %v161 = vshrl.u32 %v160, 7
  %v162 = vsub.s32 0, %v161
  %v163 = vrot.slane %v159, %v162
  %v164 = vld [vmem:[%s1 + $0xa] sm:$0x1]
  %v165 = vlaneseq
  %v166 = vshrl.u32 %v165, 7
  %v167 = vsub.s32 0, %v166
  %v168 = vrot.slane %v164, %v167
  %v169 = vld [vmem:[%s1 + $0xb] sm:$0x1]
  %v170 = vlaneseq
  %v171 = vshrl.u32 %v170, 7
  %v172 = vsub.s32 0, %v171
  %v173 = vrot.slane %v169, %v172
  %v174 = vld [vmem:[%s1 + $0xc] sm:$0x1]
  %v175 = vlaneseq
  %v176 = vshrl.u32 %v175, 7
  %v177 = vsub.s32 0, %v176
  %v178 = vrot.slane %v174, %v177
  %v179 = vld [vmem:[%s1 + $0x10] sm:$0x1f]
  %v180 = vld [vmem:[%s1 + $0x15] sm:$0x1]
  %v181 = vmax.f32 %v116, 0.0
  %183 = vset.pattern.permute.xlu0 0
  %184 = vperm.xlu0 %183, %v181
  %v185 = vpop.permute.xlu0 %184
  %v187 = vmul.f32 %v185, %v158
  %188 = vset.pattern.permute.xlu0 1
  %189 = vperm.xlu0 %188, %v181
  %v190 = vpop.permute.xlu0 %189
  %v192 = vmul.f32 %v190, %v163
  %193 = vset.pattern.permute.xlu0 2
  %194 = vperm.xlu0 %193, %v181
  %v195 = vpop.permute.xlu0 %194
  %v197 = vmul.f32 %v195, %v168
  %198 = vset.pattern.permute.xlu0 3
  %199 = vperm.xlu0 %198, %v181
  %v200 = vpop.permute.xlu0 %199
  %v202 = vmul.f32 %v200, %v173
  %203 = vset.pattern.permute.xlu0 4
  %204 = vperm.xlu0 %203, %v181
  %v205 = vpop.permute.xlu0 %204
  %v207 = vmul.f32 %v205, %v178
  %v208 = vadd.f32 %v187, %v192
  %v209 = vadd.f32 %v197, %v202
  %v210 = vadd.f32 %v208, %v209
  %v211 = vadd.f32 %v207, %v121
  %v212 = vadd.f32 %v210, %v211
  %v213 = vmax.f32 %v212, 0.0
  %215 = vset.pattern.permute.xlu0 0
  %216 = vperm.xlu0 %215, %v213
  %v217 = vpop.permute.xlu0 %216
  %v219 = vmul.f32 %v217, %v158
  %220 = vset.pattern.permute.xlu0 1
  %221 = vperm.xlu0 %220, %v213
  %v222 = vpop.permute.xlu0 %221
  %v224 = vmul.f32 %v222, %v163
  %225 = vset.pattern.permute.xlu0 2
  %226 = vperm.xlu0 %225, %v213
  %v227 = vpop.permute.xlu0 %226
  %v229 = vmul.f32 %v227, %v168
  %230 = vset.pattern.permute.xlu0 3
  %231 = vperm.xlu0 %230, %v213
  %v232 = vpop.permute.xlu0 %231
  %v234 = vmul.f32 %v232, %v173
  %235 = vset.pattern.permute.xlu0 4
  %236 = vperm.xlu0 %235, %v213
  %v237 = vpop.permute.xlu0 %236
  %v239 = vmul.f32 %v237, %v178
  %v240 = vadd.f32 %v219, %v224
  %v241 = vadd.f32 %v229, %v234
  %v242 = vadd.f32 %v240, %v241
  %v243 = vadd.f32 %v239, %v126
  %v244 = vadd.f32 %v242, %v243
  %v245 = vmax.f32 %v244, 0.0
  %247 = vset.pattern.permute.xlu0 0
  %248 = vperm.xlu0 %247, %v245
  %v249 = vpop.permute.xlu0 %248
  %v251 = vmul.f32 %v249, %v158
  %252 = vset.pattern.permute.xlu0 1
  %253 = vperm.xlu0 %252, %v245
  %v254 = vpop.permute.xlu0 %253
  %v256 = vmul.f32 %v254, %v163
  %257 = vset.pattern.permute.xlu0 2
  %258 = vperm.xlu0 %257, %v245
  %v259 = vpop.permute.xlu0 %258
  %v261 = vmul.f32 %v259, %v168
  %262 = vset.pattern.permute.xlu0 3
  %263 = vperm.xlu0 %262, %v245
  %v264 = vpop.permute.xlu0 %263
  %v266 = vmul.f32 %v264, %v173
  %267 = vset.pattern.permute.xlu0 4
  %268 = vperm.xlu0 %267, %v245
  %v269 = vpop.permute.xlu0 %268
  %v271 = vmul.f32 %v269, %v178
  %v272 = vadd.f32 %v251, %v256
  %v273 = vadd.f32 %v261, %v266
  %v274 = vadd.f32 %v272, %v273
  %v275 = vadd.f32 %v271, %v131
  %v276 = vadd.f32 %v274, %v275
  %v277 = vmax.f32 %v276, 0.0
  %279 = vset.pattern.permute.xlu0 0
  %280 = vperm.xlu0 %279, %v277
  %v281 = vpop.permute.xlu0 %280
  %v283 = vmul.f32 %v281, %v158
  %284 = vset.pattern.permute.xlu0 1
  %285 = vperm.xlu0 %284, %v277
  %v286 = vpop.permute.xlu0 %285
  %v288 = vmul.f32 %v286, %v163
  %289 = vset.pattern.permute.xlu0 2
  %290 = vperm.xlu0 %289, %v277
  %v291 = vpop.permute.xlu0 %290
  %v293 = vmul.f32 %v291, %v168
  %294 = vset.pattern.permute.xlu0 3
  %295 = vperm.xlu0 %294, %v277
  %v296 = vpop.permute.xlu0 %295
  %v298 = vmul.f32 %v296, %v173
  %299 = vset.pattern.permute.xlu0 4
  %300 = vperm.xlu0 %299, %v277
  %v301 = vpop.permute.xlu0 %300
  %v303 = vmul.f32 %v301, %v178
  %v304 = vadd.f32 %v283, %v288
  %v305 = vadd.f32 %v293, %v298
  %v306 = vadd.f32 %v304, %v305
  %v307 = vadd.f32 %v303, %v136
  %v308 = vadd.f32 %v306, %v307
  %v309 = vmax.f32 %v308, 0.0
  %311 = vset.pattern.permute.xlu0 0
  %312 = vperm.xlu0 %311, %v309
  %v313 = vpop.permute.xlu0 %312
  %v315 = vmul.f32 %v313, %v158
  %316 = vset.pattern.permute.xlu0 1
  %317 = vperm.xlu0 %316, %v309
  %v318 = vpop.permute.xlu0 %317
  %v320 = vmul.f32 %v318, %v163
  %321 = vset.pattern.permute.xlu0 2
  %322 = vperm.xlu0 %321, %v309
  %v323 = vpop.permute.xlu0 %322
  %v325 = vmul.f32 %v323, %v168
  %326 = vset.pattern.permute.xlu0 3
  %327 = vperm.xlu0 %326, %v309
  %v328 = vpop.permute.xlu0 %327
  %v330 = vmul.f32 %v328, %v173
  %331 = vset.pattern.permute.xlu0 4
  %332 = vperm.xlu0 %331, %v309
  %v333 = vpop.permute.xlu0 %332
  %v335 = vmul.f32 %v333, %v178
  %v336 = vadd.f32 %v315, %v320
  %v337 = vadd.f32 %v325, %v330
  %v338 = vadd.f32 %v336, %v337
  %v339 = vadd.f32 %v335, %v141
  %v340 = vadd.f32 %v338, %v339
  %v341 = vmax.f32 %v340, 0.0
  %343 = vset.pattern.permute.xlu0 0
  %344 = vperm.xlu0 %343, %v341
  %v345 = vpop.permute.xlu0 %344
  %v347 = vmul.f32 %v345, %v158
  %348 = vset.pattern.permute.xlu0 1
  %349 = vperm.xlu0 %348, %v341
  %v350 = vpop.permute.xlu0 %349
  %v352 = vmul.f32 %v350, %v163
  %353 = vset.pattern.permute.xlu0 2
  %354 = vperm.xlu0 %353, %v341
  %v355 = vpop.permute.xlu0 %354
  %v357 = vmul.f32 %v355, %v168
  %358 = vset.pattern.permute.xlu0 3
  %359 = vperm.xlu0 %358, %v341
  %v360 = vpop.permute.xlu0 %359
  %v362 = vmul.f32 %v360, %v173
  %363 = vset.pattern.permute.xlu0 4
  %364 = vperm.xlu0 %363, %v341
  %v365 = vpop.permute.xlu0 %364
  %v367 = vmul.f32 %v365, %v178
  %v368 = vadd.f32 %v347, %v352
  %v369 = vadd.f32 %v357, %v362
  %v370 = vadd.f32 %v368, %v369
  %v371 = vadd.f32 %v367, %v146
  %v372 = vadd.f32 %v370, %v371
  %v373 = vmax.f32 %v372, 0.0
  %375 = vset.pattern.permute.xlu0 0
  %376 = vperm.xlu0 %375, %v373
  %v377 = vpop.permute.xlu0 %376
  %v379 = vmul.f32 %v377, %v158
  %380 = vset.pattern.permute.xlu0 1
  %381 = vperm.xlu0 %380, %v373
  %v382 = vpop.permute.xlu0 %381
  %v384 = vmul.f32 %v382, %v163
  %385 = vset.pattern.permute.xlu0 2
  %386 = vperm.xlu0 %385, %v373
  %v387 = vpop.permute.xlu0 %386
  %v389 = vmul.f32 %v387, %v168
  %390 = vset.pattern.permute.xlu0 3
  %391 = vperm.xlu0 %390, %v373
  %v392 = vpop.permute.xlu0 %391
  %v394 = vmul.f32 %v392, %v173
  %395 = vset.pattern.permute.xlu0 4
  %396 = vperm.xlu0 %395, %v373
  %v397 = vpop.permute.xlu0 %396
  %v399 = vmul.f32 %v397, %v178
  %v400 = vadd.f32 %v379, %v384
  %v401 = vadd.f32 %v389, %v394
  %v402 = vadd.f32 %v400, %v401
  %v403 = vadd.f32 %v399, %v151
  %v404 = vadd.f32 %v402, %v403
  %v405 = vmax.f32 %v404, 0.0
  %v406 = vlaneseq
  %v407 = vshrl.u32 %v406, 7
  %v408 = vsub.s32 0, %v407
  %v409 = vrot.slane %v180, %v408
  %vm410 = vcmask 39936
  %v412 = vsel %vm410, %v405, 0
  %vm414 = vcmask 1044480
  %v416 = vsel %vm414, %v179, 0
  %418 = vmatprep.subr.mxu0 0.0
  %419 = vmatpush1.msra.mxu0 %v416
  %420 = vmatprep.subr.mxu0 0.0
  %421 = vmatpush1.msra.mxu0 0.0
  %422 = vmatprep.subr.mxu0 0.0
  %423 = vmatpush1.msra.mxu0 0.0
  %424 = vmatprep.subr.mxu0 0.0
  %425 = vmatpush1.msra.mxu0 0.0
  %426 = vmatprep.subr.mxu0 0.0
  %427 = vmatpush1.msra.mxu0 0.0
  %428 = vmatprep.subr.mxu0 0.0
  %429 = vmatpush1.msra.mxu0 0.0
  %430 = vmatprep.subr.mxu0 0.0
  %431 = vmatpush1.msra.mxu0 0.0
  %432 = vmatprep.subr.mxu0 0.0
  %433 = vmatpush1.msra.mxu0 0.0
  %434 = vmatprep.subr.mxu0 0.0
  %435 = vmatpush1.msra.mxu0 0.0
  %436 = vmatprep.subr.mxu0 0.0
  %437 = vmatpush1.msra.mxu0 0.0
  %438 = vmatprep.subr.mxu0 0.0
  %439 = vmatpush1.msra.mxu0 0.0
  %440 = vmatprep.subr.mxu0 0.0
  %441 = vmatpush1.msra.mxu0 0.0
  %442 = vmatprep.subr.mxu0 0.0
  %443 = vmatpush1.msra.mxu0 0.0
  %444 = vmatprep.subr.mxu0 0.0
  %445 = vmatpush1.msra.mxu0 0.0
  %446 = vmatprep.subr.mxu0 0.0
  %447 = vmatpush1.msra.mxu0 0.0
  %448 = vmatprep.subr.mxu0 0.0
  %449 = vmatpush1.msra.mxu0 0.0
  %450 = vmatprep.subr.mxu0 0.0
  %451 = vmatpush1.msra.mxu0 0.0
  %452 = vmatprep.subr.mxu0 0.0
  %453 = vmatpush1.msra.mxu0 0.0
  %454 = vmatprep.subr.mxu0 0.0
  %455 = vmatpush1.msra.mxu0 0.0
  %456 = vmatprep.subr.mxu0 0.0
  %457 = vmatpush1.msra.mxu0 0.0
  %458 = vmatprep.subr.mxu0 0.0
  %459 = vmatpush1.msra.mxu0 0.0
  %460 = vmatprep.subr.mxu0 0.0
  %461 = vmatpush1.msra.mxu0 0.0
  %462 = vmatprep.subr.mxu0 0.0
  %463 = vmatpush1.msra.mxu0 0.0
  %464 = vmatprep.subr.mxu0 0.0
  %465 = vmatpush1.msra.mxu0 0.0
  %466 = vmatprep.subr.mxu0 0.0
  %467 = vmatpush1.msra.mxu0 0.0
  %468 = vmatprep.subr.mxu0 0.0
  %469 = vmatpush1.msra.mxu0 0.0
  %470 = vmatprep.subr.mxu0 0.0
  %471 = vmatpush1.msra.mxu0 0.0
  %472 = vmatprep.subr.mxu0 0.0
  %473 = vmatpush1.msra.mxu0 0.0
  %474 = vmatprep.subr.mxu0 0.0
  %475 = vmatpush1.msra.mxu0 0.0
  %476 = vmatprep.subr.mxu0 0.0
  %477 = vmatpush1.msra.mxu0 0.0
  %478 = vmatprep.subr.mxu0 0.0
  %479 = vmatpush1.msra.mxu0 0.0
  %480 = vmatprep.subr.mxu0 0.0
  %481 = vmatpush1.msra.mxu0 0.0
  %482 = vmatprep.mubr.f32.mxu0 0.0
  %483 = vmatmul.mubr.f32.gmra.mrb[0].mxu0 %v412
  %v484 = vpop.f32.mrb[0].mxu0
  %v485 = vadd.f32 %v409, %v484
  %v486 = vpop.f32.mrb[0].mxu0
  %487 = vdwg.mxu0
  %488 = vst [vmem:[%s2] sm:$0xff] %v485
  // Predicated region
  $region10: #{_forward_impl.1} parent=0 // pred_check
    _
  $region11: #{_forward_impl.1} parent=0 // pred_check_branch
    %490 = sbr.rel (0) target = $region13
  $region12: #{_forward_impl.1} parent=0 // pred_region
    _
  $region13: #{_forward_impl.1} parent=0 // pred_fallthru
    _
  // Predicated region
  $region14: #{_forward_impl.1} parent=0 // pred_check
    _
  $region15: #{_forward_impl.1} parent=0 // pred_check_branch
    %492 = sbr.rel (0) target = $region17
  $region16: #{_forward_impl.1} parent=0 // pred_region
    _
  $region17: #{_forward_impl.1} parent=0 // pred_fallthru
    _

</llo_original>
